<compile_context>
chip_gen: v7x
topology: tpu7x:2x2x1
jax: 0.10.0
libtpu: 0.0.40
codegen_flags: <defaults>
</compile_context>

<pallas_src>
import jax
import jax.numpy as jnp
from jax.experimental import pallas as pl
from jax.experimental.pallas import tpu as pltpu


def _round_up(n, m):
    return ((n + m - 1) // m) * m


def _kernel(x_ref, w1_ref, b1_ref, w2_ref, b2_ref, w3_ref, b3_ref, o_ref):
    x = x_ref[...]  # (tile_b, F) float32

    # Linear 1 + ReLU
    h1 = jnp.dot(x, w1_ref[...], preferred_element_type=jnp.float32) + b1_ref[...]
    h1 = jnp.maximum(h1, 0.0)

    # Linear 2 + ReLU
    h2 = jnp.dot(h1, w2_ref[...], preferred_element_type=jnp.float32) + b2_ref[...]
    h2 = jnp.maximum(h2, 0.0)

    # Linear 3 + Sigmoid (EUP)
    z = jnp.dot(h2, w3_ref[...], preferred_element_type=jnp.float32) + b3_ref[...]
    logits = jax.nn.sigmoid(z)

    # Softmax over dim=1.  logits in (0, 1) -> exp in (1, e): no max-subtraction.
    e = jnp.exp(logits)
    denom = jnp.sum(e, axis=-1, keepdims=True)
    o_ref[...] = (e * pl.reciprocal(denom, approx=False)).astype(o_ref.dtype)


def baseline_nn_forward(x, params, *, tile_b=8192):
    """x: (B, input_size) float32. params: dict of pre-transposed weights/biases."""
    B, F = x.shape
    U = params["w1t"].shape[1]

    # Batch tile: multiple of 8 (sublane rule), capped so the grid has >= 2
    # steps when the batch allows it (feeds both v7x TensorCores).
    tile_b = max(8, (int(tile_b) // 8) * 8)
    tile_b = min(tile_b, _round_up(pl.cdiv(B, 2), 8))
    grid = (pl.cdiv(B, tile_b),)

    cost = pl.CostEstimate(
        flops=2 * B * (F * U + U * U + U * F),
        transcendentals=2 * B * F,  # sigmoid + softmax exp
        bytes_accessed=4 * (2 * B * F + F * U + U * U + U * F + 2 * U + F),
    )

    w1_spec = pl.BlockSpec((F, U), lambda i: (0, 0))
    w2_spec = pl.BlockSpec((U, U), lambda i: (0, 0))
    w3_spec = pl.BlockSpec((U, F), lambda i: (0, 0))
    b_u_spec = pl.BlockSpec((1, U), lambda i: (0, 0))
    b_f_spec = pl.BlockSpec((1, F), lambda i: (0, 0))

    x32 = x.astype(jnp.float32)

    out = pl.pallas_call(
        _kernel,
        out_shape=jax.ShapeDtypeStruct((B, F), jnp.float32),
        grid_spec=pltpu.PrefetchScalarGridSpec(
            num_scalar_prefetch=0,
            grid=grid,
            in_specs=[
                pl.BlockSpec((tile_b, F), lambda i: (i, 0)),  # x (batch-tiled)
                w1_spec, b_u_spec,                            # layer 1
                w2_spec, b_u_spec,                            # layer 2
                w3_spec, b_f_spec,                            # layer 3
            ],
            out_specs=pl.BlockSpec((tile_b, F), lambda i: (i, 0)),
        ),
        compiler_params=pltpu.CompilerParams(
            dimension_semantics=("parallel",),  # shard batch across TCs (v7x)
        ),
        cost_estimate=cost,
    )(
        x32,
        params["w1t"], params["b1"],
        params["w2t"], params["b2"],
        params["w3t"], params["b3"],
    )
    return out


def init_params(input_size=12, num_units=12, seed=42):
    """Deterministic synthetic parameters (PyTorch Linear shapes: W is (out, in))."""
    keys = jax.random.split(jax.random.PRNGKey(seed), 6)

    def lin(kw, kb, fan_in, fan_out):
        bound = 1.0 / jnp.sqrt(jnp.float32(fan_in))
        w = jax.random.uniform(kw, (fan_out, fan_in), jnp.float32, -bound, bound)
        b = jax.random.uniform(kb, (fan_out,), jnp.float32, -bound, bound)
        return w, b

    w1, b1 = lin(keys[0], keys[1], input_size, num_units)
    w2, b2 = lin(keys[2], keys[3], num_units, num_units)
    w3, b3 = lin(keys[4], keys[5], num_units, input_size)

    # Pre-transposed for x @ Wt inside the kernel; biases kept 2D (1, out).
    return {
        "w1t": w1.T, "b1": b1.reshape(1, -1),
        "w2t": w2.T, "b2": b2.reshape(1, -1),
        "w3t": w3.T, "b3": b3.reshape(1, -1),
    }


def reference_forward(x, params):
    h1 = jnp.maximum(x @ params["w1t"] + params["b1"], 0.0)
    h2 = jnp.maximum(h1 @ params["w2t"] + params["b2"], 0.0)
    logits = jax.nn.sigmoid(h2 @ params["w3t"] + params["b3"])
    return jax.nn.softmax(logits, axis=1)


if __name__ == "__main__":
    input_size = 12
    num_units = 12

    params = init_params(input_size, num_units)

    # Main small-shape test (even batch).
    batch = 8
    x = jax.random.normal(jax.random.PRNGKey(0), (batch, input_size), jnp.float32)
    out = jax.block_until_ready(baseline_nn_forward(x, params))
    ref = reference_forward(x, params)
    assert out.shape == (batch, input_size)
    assert jnp.allclose(out, ref, atol=1e-5, rtol=1e-5), "mismatch vs JAX reference"
    assert jnp.allclose(jnp.sum(out, axis=1), 1.0, atol=1e-5), "softmax rows must sum to 1"

    # Ragged-batch test (exercises the cdiv grid / masked edge block).
    batch2 = 13
    x2 = jax.random.normal(jax.random.PRNGKey(1), (batch2, input_size), jnp.float32)
    out2 = jax.block_until_ready(baseline_nn_forward(x2, params))
    ref2 = reference_forward(x2, params)
    assert out2.shape == (batch2, input_size)
    assert jnp.allclose(out2, ref2, atol=1e-5, rtol=1e-5), "ragged-batch mismatch"

    print("KERNEL_OK")
</pallas_src>

<mosaic_0001>
module attributes {stable_mosaic.version = 11 : i64} {
  func.func @_kernel(%arg0: i32, %arg1: memref<8x12xf32, #tpu.memory_space<vmem>>, %arg2: memref<12x12xf32, #tpu.memory_space<vmem>>, %arg3: memref<1x12xf32, #tpu.memory_space<vmem>>, %arg4: memref<12x12xf32, #tpu.memory_space<vmem>>, %arg5: memref<1x12xf32, #tpu.memory_space<vmem>>, %arg6: memref<12x12xf32, #tpu.memory_space<vmem>>, %arg7: memref<1x12xf32, #tpu.memory_space<vmem>>, %arg8: memref<8x12xf32, #tpu.memory_space<vmem>>) attributes {dimension_semantics = [#tpu.dimension_semantics<parallel>], iteration_bounds = array<i64: 1>, scalar_prefetch = 0 : i64, scratch_operands = 0 : i64, tpu.core_type = #tpu.core_type<tc>, window_params = [{transform_indices = @transform_0, window_bounds = array<i64: 8, 12>}, {pipeline_mode = #tpu.pipeline_mode<synchronous>, transform_indices = @transform_1, window_bounds = array<i64: 12, 12>}, {pipeline_mode = #tpu.pipeline_mode<synchronous>, transform_indices = @transform_2, window_bounds = array<i64: 1, 12>}, {pipeline_mode = #tpu.pipeline_mode<synchronous>, transform_indices = @transform_3, window_bounds = array<i64: 12, 12>}, {pipeline_mode = #tpu.pipeline_mode<synchronous>, transform_indices = @transform_4, window_bounds = array<i64: 1, 12>}, {pipeline_mode = #tpu.pipeline_mode<synchronous>, transform_indices = @transform_5, window_bounds = array<i64: 12, 12>}, {pipeline_mode = #tpu.pipeline_mode<synchronous>, transform_indices = @transform_6, window_bounds = array<i64: 1, 12>}, {transform_indices = @transform_7, window_bounds = array<i64: 8, 12>}]} {
    %c0 = arith.constant 0 : index
    %c0_0 = arith.constant 0 : index
    %0 = vector.load %arg1[%c0, %c0_0] : memref<8x12xf32, #tpu.memory_space<vmem>>, vector<8x12xf32>
    %c0_1 = arith.constant 0 : index
    %c0_2 = arith.constant 0 : index
    %1 = vector.load %arg2[%c0_1, %c0_2] : memref<12x12xf32, #tpu.memory_space<vmem>>, vector<12x12xf32>
    %cst = arith.constant dense<0.000000e+00> : vector<8x12xf32>
    %2 = tpu.matmul %0, %1, %cst {dimension_numbers = #tpu.dot_dimension_numbers<[1], [0], [0], [1], [0, 0, 1, 1], [], []>} : vector<8x12xf32>, vector<12x12xf32>, vector<8x12xf32> -> vector<8x12xf32>
    %c0_3 = arith.constant 0 : index
    %c0_4 = arith.constant 0 : index
    %3 = vector.load %arg3[%c0_3, %c0_4] : memref<1x12xf32, #tpu.memory_space<vmem>>, vector<1x12xf32>
    %4 = vector.broadcast %3 : vector<1x12xf32> to vector<8x12xf32>
    %5 = arith.addf %2, %4 : vector<8x12xf32>
    %cst_5 = arith.constant 0.000000e+00 : f32
    %6 = vector.broadcast %cst_5 : f32 to vector<8x12xf32>
    %7 = arith.maximumf %5, %6 : vector<8x12xf32>
    %c0_6 = arith.constant 0 : index
    %c0_7 = arith.constant 0 : index
    %8 = vector.load %arg4[%c0_6, %c0_7] : memref<12x12xf32, #tpu.memory_space<vmem>>, vector<12x12xf32>
    %cst_8 = arith.constant dense<0.000000e+00> : vector<8x12xf32>
    %9 = tpu.matmul %7, %8, %cst_8 {dimension_numbers = #tpu.dot_dimension_numbers<[1], [0], [0], [1], [0, 0, 1, 1], [], []>} : vector<8x12xf32>, vector<12x12xf32>, vector<8x12xf32> -> vector<8x12xf32>
    %c0_9 = arith.constant 0 : index
    %c0_10 = arith.constant 0 : index
    %10 = vector.load %arg5[%c0_9, %c0_10] : memref<1x12xf32, #tpu.memory_space<vmem>>, vector<1x12xf32>
    %11 = vector.broadcast %10 : vector<1x12xf32> to vector<8x12xf32>
    %12 = arith.addf %9, %11 : vector<8x12xf32>
    %cst_11 = arith.constant 0.000000e+00 : f32
    %13 = vector.broadcast %cst_11 : f32 to vector<8x12xf32>
    %14 = arith.maximumf %12, %13 : vector<8x12xf32>
    %c0_12 = arith.constant 0 : index
    %c0_13 = arith.constant 0 : index
    %15 = vector.load %arg6[%c0_12, %c0_13] : memref<12x12xf32, #tpu.memory_space<vmem>>, vector<12x12xf32>
    %cst_14 = arith.constant dense<0.000000e+00> : vector<8x12xf32>
    %16 = tpu.matmul %14, %15, %cst_14 {dimension_numbers = #tpu.dot_dimension_numbers<[1], [0], [0], [1], [0, 0, 1, 1], [], []>} : vector<8x12xf32>, vector<12x12xf32>, vector<8x12xf32> -> vector<8x12xf32>
    %c0_15 = arith.constant 0 : index
    %c0_16 = arith.constant 0 : index
    %17 = vector.load %arg7[%c0_15, %c0_16] : memref<1x12xf32, #tpu.memory_space<vmem>>, vector<1x12xf32>
    %18 = vector.broadcast %17 : vector<1x12xf32> to vector<8x12xf32>
    %19 = arith.addf %16, %18 : vector<8x12xf32>
    %20 = arith.negf %19 : vector<8x12xf32>
    %21 = math.exp %20 : vector<8x12xf32>
    %cst_17 = arith.constant 1.000000e+00 : f32
    %22 = vector.broadcast %cst_17 : f32 to vector<8x12xf32>
    %23 = arith.addf %22, %21 : vector<8x12xf32>
    %24 = arith.divf %22, %23 : vector<8x12xf32>
    %25 = math.exp %24 : vector<8x12xf32>
    %cst_18 = arith.constant dense<0.000000e+00> : vector<8xf32>
    %26 = vector.multi_reduction <add>, %25, %cst_18 [1] : vector<8x12xf32> to vector<8xf32>
    %27 = vector.shape_cast %26 : vector<8xf32> to vector<8x1xf32>
    %28 = tpu.reciprocal %27 : vector<8x1xf32> -> vector<8x1xf32>
    %29 = vector.broadcast %28 : vector<8x1xf32> to vector<8x12xf32>
    %30 = arith.mulf %25, %29 : vector<8x12xf32>
    %c0_19 = arith.constant 0 : index
    %c0_20 = arith.constant 0 : index
    %31 = vector.load %arg8[%c0_19, %c0_20] : memref<8x12xf32, #tpu.memory_space<vmem>>, vector<8x12xf32>
    tpu.vector_store %arg8[%c0_19, %c0_20], %30 {strides = array<i32>} : memref<8x12xf32, #tpu.memory_space<vmem>>, vector<8x12xf32>,
    return
  }
  func.func @transform_0(%arg0: i32) -> (i32, i32) {
    %c0_i32 = arith.constant 0 : i32
    %c0_i32_0 = arith.constant 0 : i32
    return %arg0, %c0_i32 : i32, i32
  }
  func.func @transform_1(%arg0: i32) -> (i32, i32) {
    %c0_i32 = arith.constant 0 : i32
    %c0_i32_0 = arith.constant 0 : i32
    %c0_i32_1 = arith.constant 0 : i32
    return %c0_i32, %c0_i32_0 : i32, i32
  }
  func.func @transform_2(%arg0: i32) -> (i32, i32) {
    %c0_i32 = arith.constant 0 : i32
    %c0_i32_0 = arith.constant 0 : i32
    %c0_i32_1 = arith.constant 0 : i32
    return %c0_i32, %c0_i32_0 : i32, i32
  }
  func.func @transform_3(%arg0: i32) -> (i32, i32) {
    %c0_i32 = arith.constant 0 : i32
    %c0_i32_0 = arith.constant 0 : i32
    %c0_i32_1 = arith.constant 0 : i32
    return %c0_i32, %c0_i32_0 : i32, i32
  }
  func.func @transform_4(%arg0: i32) -> (i32, i32) {
    %c0_i32 = arith.constant 0 : i32
    %c0_i32_0 = arith.constant 0 : i32
    %c0_i32_1 = arith.constant 0 : i32
    return %c0_i32, %c0_i32_0 : i32, i32
  }
  func.func @transform_5(%arg0: i32) -> (i32, i32) {
    %c0_i32 = arith.constant 0 : i32
    %c0_i32_0 = arith.constant 0 : i32
    %c0_i32_1 = arith.constant 0 : i32
    return %c0_i32, %c0_i32_0 : i32, i32
  }
  func.func @transform_6(%arg0: i32) -> (i32, i32) {
    %c0_i32 = arith.constant 0 : i32
    %c0_i32_0 = arith.constant 0 : i32
    %c0_i32_1 = arith.constant 0 : i32
    return %c0_i32, %c0_i32_0 : i32, i32
  }
  func.func @transform_7(%arg0: i32) -> (i32, i32) {
    %c0_i32 = arith.constant 0 : i32
    %c0_i32_0 = arith.constant 0 : i32
    return %arg0, %c0_i32 : i32, i32
  }
}

</mosaic_0001>

<llo_original>
// kernel: tpu_custom_call.1
$region0: #{tpu_custom_call.1}
  #allocation0 [shape = 'u32[]', space=smem, size = 0x4, offset = 0x4, fixed_abs, tag = 'smem constant byte address 0x4 - core index']
  #allocation1 [shape = 'u32[144,128]{1,0:T(1,128)}', space=vmem, size = 0x12000, scoped, tag = 'internal scratch']
  %s0 = inlined_call_operand.hbm [shape: f32[8,12], index: 0, kind: input, shape index: {}]
  %s1 = inlined_call_operand.hbm [shape: f32[12,12], index: 1, kind: input, shape index: {}]
  %s2 = inlined_call_operand.vmem [shape: f32[1,12], index: 2, kind: input, shape index: {}]
  %s3 = inlined_call_operand.hbm [shape: f32[12,12], index: 3, kind: input, shape index: {}]
  %s4 = inlined_call_operand.vmem [shape: f32[1,12], index: 4, kind: input, shape index: {}]
  %s5 = inlined_call_operand.vmem [shape: f32[12,12], index: 5, kind: input, shape index: {}]
  %s6 = inlined_call_operand.vmem [shape: f32[1,12], index: 6, kind: input, shape index: {}]
  %s7 = inlined_call_operand.hbm [shape: f32[8,12], index: 7, kind: output, shape index: {}]
  %s8 = sld [smem:[#allocation0]]
  $region50: #{tpu_custom_call.1} parent=0
    _
  %s10 = ssub.s32 1, %s8
  %s11 = scalar_select 0, %s10, %s8
  $region1: #{tpu_custom_call.1} parent=0
    #allocation2 [shape = 'u8[4096]{0}', space=vmem, size = 0x1000, scoped, tag = 'input window, operand 0, single buffered']
    #allocation3 [shape = 's32[1]{0}', space=sflag, size = 0x4, scoped, tag = 'scoped memory for tpu_custom_call.1']
    #allocation4 [shape = 's32[1]{0}', space=sflag, size = 0x4, scoped, tag = 'scoped memory for tpu_custom_call.1']
    #allocation5 [shape = 'u8[8192]{0}', space=vmem, size = 0x2000, scoped, tag = 'input window, operand 1, single buffered']
    #allocation6 [shape = 's32[1]{0}', space=sflag, size = 0x4, scoped, tag = 'scoped memory for tpu_custom_call.1']
    #allocation7 [shape = 'u8[8192]{0}', space=vmem, size = 0x2000, scoped, tag = 'input window, operand 3, single buffered']
    #allocation8 [shape = 'u8[4096]{0}', space=vmem, size = 0x1000, scoped, tag = 'output window, operand 0, single buffered']
    %12 = vsyncpa [#allocation3], 0
    %13 = vsyncpa [#allocation6], 0
    %14 = vsyncpa [#allocation4], 0
    // Predicated region
    $region2: #{tpu_custom_call.1} parent=1 // pred_check
      _
    $region3: #{tpu_custom_call.1} parent=1 // pred_check_branch
      %16 = sbr.rel (0) target = $region5
    $region4: #{tpu_custom_call.1} parent=1 // pred_region
      %s18 = ssub.s32 128, 128
      %19 = vsyncadd [#allocation3], %s18
      %s21 = sshll.u32 [#allocation2], 4
      %s22 = int_to_ptr.vmem [resolvable:$true] %s21
      %24 = dma.hbm_to_vmem [thread:$0]  %s0, 128, %s22, [#allocation3]
    $region5: #{tpu_custom_call.1} parent=1 // pred_fallthru
      _
    // Predicated region
    $region6: #{tpu_custom_call.1} parent=1 // pred_check
      _
    $region7: #{tpu_custom_call.1} parent=1 // pred_check_branch
      %26 = sbr.rel (0) target = $region9
    $region8: #{tpu_custom_call.1} parent=1 // pred_region
      %s28 = ssub.s32 256, 256
      %29 = vsyncadd [#allocation6], %s28
      %s30 = sshll.u32 [#allocation5], 4
      %s31 = int_to_ptr.vmem [resolvable:$true] %s30
      %36 = dma.hbm_to_vmem [thread:$0]  %s1, 256, %s31, [#allocation6], 128, 128, 8
    $region9: #{tpu_custom_call.1} parent=1 // pred_fallthru
      _
    // Predicated region
    $region10: #{tpu_custom_call.1} parent=1 // pred_check
      _
    $region11: #{tpu_custom_call.1} parent=1 // pred_check_branch
      %38 = sbr.rel (0) target = $region13
    $region12: #{tpu_custom_call.1} parent=1 // pred_region
      _
    $region13: #{tpu_custom_call.1} parent=1 // pred_fallthru
      _
    // Predicated region
    $region14: #{tpu_custom_call.1} parent=1 // pred_check
      _
    $region15: #{tpu_custom_call.1} parent=1 // pred_check_branch
      %40 = sbr.rel (0) target = $region17
    $region16: #{tpu_custom_call.1} parent=1 // pred_region
      %s42 = ssub.s32 256, 256
      %43 = vsyncadd [#allocation6], %s42
      %s44 = sshll.u32 [#allocation7], 4
      %s45 = int_to_ptr.vmem [resolvable:$true] %s44
      %50 = dma.hbm_to_vmem [thread:$0]  %s3, 256, %s45, [#allocation6], 128, 128, 8
    $region17: #{tpu_custom_call.1} parent=1 // pred_fallthru
      _
    // Predicated region
    $region18: #{tpu_custom_call.1} parent=1 // pred_check
      _
    $region19: #{tpu_custom_call.1} parent=1 // pred_check_branch
      %52 = sbr.rel (0) target = $region21
    $region20: #{tpu_custom_call.1} parent=1 // pred_region
      _
    $region21: #{tpu_custom_call.1} parent=1 // pred_fallthru
      _
    // Predicated region
    $region22: #{tpu_custom_call.1} parent=1 // pred_check
      _
    $region23: #{tpu_custom_call.1} parent=1 // pred_check_branch
      %54 = sbr.rel (0) target = $region25
    $region24: #{tpu_custom_call.1} parent=1 // pred_region
      _
    $region25: #{tpu_custom_call.1} parent=1 // pred_fallthru
      _
    // Predicated region
    $region26: #{tpu_custom_call.1} parent=1 // pred_check
      _
    $region27: #{tpu_custom_call.1} parent=1 // pred_check_branch
      %56 = sbr.rel (0) target = $region29
    $region28: #{tpu_custom_call.1} parent=1 // pred_region
      _
    $region29: #{tpu_custom_call.1} parent=1 // pred_fallthru
      _
    // Predicated region
    $region30: #{tpu_custom_call.1} parent=1 // pred_check
      _
    $region31: #{tpu_custom_call.1} parent=1 // pred_check_branch
      %58 = sbr.rel (0) target = $region33
    $region32: #{tpu_custom_call.1} parent=1 // pred_region
      %59 = dma.done [#allocation3], 128
    $region33: #{tpu_custom_call.1} parent=1 // pred_fallthru
      _
    // Predicated region
    $region34: #{tpu_custom_call.1} parent=1 // pred_check
      _
    $region35: #{tpu_custom_call.1} parent=1 // pred_check_branch
      %61 = sbr.rel (0) target = $region37
    $region36: #{tpu_custom_call.1} parent=1 // pred_region
      %62 = dma.done [#allocation6], 256
    $region37: #{tpu_custom_call.1} parent=1 // pred_fallthru
      _
    // Predicated region
    $region38: #{tpu_custom_call.1} parent=1 // pred_check
      _
    $region39: #{tpu_custom_call.1} parent=1 // pred_check_branch
      %64 = sbr.rel (0) target = $region41
    $region40: #{tpu_custom_call.1} parent=1 // pred_region
      %65 = dma.done [#allocation6], 256
    $region41: #{tpu_custom_call.1} parent=1 // pred_fallthru
      _
    %v66 = vld [vmem:[#allocation2] sm:$0xff]
    %v67 = vld [vmem:[#allocation5] sm:$0xff]
    %v68 = vld [vmem:[#allocation5 + $0x8] sm:$0xf]
    %v69 = vld [vmem:[%s2] sm:$0x1]
    %v71 = vlaneseq
    %v72 = vshrl.u32 %v71, 7
    %v73 = vsub.s32 0, %v72
    %v74 = vrot.slane %v69, %v73
    %vm76 = vcmask 97280
    %v78 = vsel %vm76, %v66, 0
    %vm80 = vcmask 1043456
    %v82 = vsel %vm80, %v68, 0
    %84 = vmatprep.subr.mxu0 0.0
    %85 = vmatpush1.msra.mxu0 %v67
    %86 = vmatprep.subr.mxu0 0.0
    %87 = vmatpush1.msra.mxu0 %v82
    %88 = vmatprep.subr.mxu0 0.0
    %89 = vmatpush1.msra.mxu0 0.0
    %90 = vmatprep.subr.mxu0 0.0
    %91 = vmatpush1.msra.mxu0 0.0
    %92 = vmatprep.subr.mxu0 0.0
    %93 = vmatpush1.msra.mxu0 0.0
    %94 = vmatprep.subr.mxu0 0.0
    %95 = vmatpush1.msra.mxu0 0.0
    %96 = vmatprep.subr.mxu0 0.0
    %97 = vmatpush1.msra.mxu0 0.0
    %98 = vmatprep.subr.mxu0 0.0
    %99 = vmatpush1.msra.mxu0 0.0
    %100 = vmatprep.subr.mxu0 0.0
    %101 = vmatpush1.msra.mxu0 0.0
    %102 = vmatprep.subr.mxu0 0.0
    %103 = vmatpush1.msra.mxu0 0.0
    %104 = vmatprep.subr.mxu0 0.0
    %105 = vmatpush1.msra.mxu0 0.0
    %106 = vmatprep.subr.mxu0 0.0
    %107 = vmatpush1.msra.mxu0 0.0
    %108 = vmatprep.subr.mxu0 0.0
    %109 = vmatpush1.msra.mxu0 0.0
    %110 = vmatprep.subr.mxu0 0.0
    %111 = vmatpush1.msra.mxu0 0.0
    %112 = vmatprep.subr.mxu0 0.0
    %113 = vmatpush1.msra.mxu0 0.0
    %114 = vmatprep.subr.mxu0 0.0
    %115 = vmatpush1.msra.mxu0 0.0
    %116 = vmatprep.subr.mxu0 0.0
    %117 = vmatpush1.msra.mxu0 0.0
    %118 = vmatprep.subr.mxu0 0.0
    %119 = vmatpush1.msra.mxu0 0.0
    %120 = vmatprep.subr.mxu0 0.0
    %121 = vmatpush1.msra.mxu0 0.0
    %122 = vmatprep.subr.mxu0 0.0
    %123 = vmatpush1.msra.mxu0 0.0
    %124 = vmatprep.subr.mxu0 0.0
    %125 = vmatpush1.msra.mxu0 0.0
    %126 = vmatprep.subr.mxu0 0.0
    %127 = vmatpush1.msra.mxu0 0.0
    %128 = vmatprep.subr.mxu0 0.0
    %129 = vmatpush1.msra.mxu0 0.0
    %130 = vmatprep.subr.mxu0 0.0
    %131 = vmatpush1.msra.mxu0 0.0
    %132 = vmatprep.subr.mxu0 0.0
    %133 = vmatpush1.msra.mxu0 0.0
    %134 = vmatprep.subr.mxu0 0.0
    %135 = vmatpush1.msra.mxu0 0.0
    %136 = vmatprep.subr.mxu0 0.0
    %137 = vmatpush1.msra.mxu0 0.0
    %138 = vmatprep.subr.mxu0 0.0
    %139 = vmatpush1.msra.mxu0 0.0
    %140 = vmatprep.subr.mxu0 0.0
    %141 = vmatpush1.msra.mxu0 0.0
    %142 = vmatprep.subr.mxu0 0.0
    %143 = vmatpush1.msra.mxu0 0.0
    %144 = vmatprep.subr.mxu0 0.0
    %145 = vmatpush1.msra.mxu0 0.0
    %146 = vmatprep.subr.mxu0 0.0
    %147 = vmatpush1.msra.mxu0 0.0
    %148 = vmatprep.mubr.f32.mxu0 0.0
    %149 = vmatmul.mubr.f32.gmra.mrb[0].mxu0 %v78
    %v150 = vpop.f32.mrb[0].mxu0
    %v151 = vadd.f32 %v74, %v150
    %v152 = vpop.f32.mrb[0].mxu0
    %153 = vdwg.mxu0
    %v154 = vmax.f32 %v151, 0.0
    %v155 = vld [vmem:[#allocation7] sm:$0xff]
    %v156 = vld [vmem:[#allocation7 + $0x8] sm:$0xf]
    %v157 = vld [vmem:[%s4] sm:$0x1]
    %v159 = vlaneseq
    %v160 = vshrl.u32 %v159, 7
    %v161 = vsub.s32 0, %v160
    %v162 = vrot.slane %v157, %v161
    %v165 = vsel %vm76, %v154, 0
    %v168 = vsel %vm80, %v156, 0
    %170 = vmatprep.subr.mxu0 0.0
    %171 = vmatpush1.msra.mxu0 %v155
    %172 = vmatprep.subr.mxu0 0.0
    %173 = vmatpush1.msra.mxu0 %v168
    %174 = vmatprep.subr.mxu0 0.0
    %175 = vmatpush1.msra.mxu0 0.0
    %176 = vmatprep.subr.mxu0 0.0
    %177 = vmatpush1.msra.mxu0 0.0
    %178 = vmatprep.subr.mxu0 0.0
    %179 = vmatpush1.msra.mxu0 0.0
    %180 = vmatprep.subr.mxu0 0.0
    %181 = vmatpush1.msra.mxu0 0.0
    %182 = vmatprep.subr.mxu0 0.0
    %183 = vmatpush1.msra.mxu0 0.0
    %184 = vmatprep.subr.mxu0 0.0
    %185 = vmatpush1.msra.mxu0 0.0
    %186 = vmatprep.subr.mxu0 0.0
    %187 = vmatpush1.msra.mxu0 0.0
    %188 = vmatprep.subr.mxu0 0.0
    %189 = vmatpush1.msra.mxu0 0.0
    %190 = vmatprep.subr.mxu0 0.0
    %191 = vmatpush1.msra.mxu0 0.0
    %192 = vmatprep.subr.mxu0 0.0
    %193 = vmatpush1.msra.mxu0 0.0
    %194 = vmatprep.subr.mxu0 0.0
    %195 = vmatpush1.msra.mxu0 0.0
    %196 = vmatprep.subr.mxu0 0.0
    %197 = vmatpush1.msra.mxu0 0.0
    %198 = vmatprep.subr.mxu0 0.0
    %199 = vmatpush1.msra.mxu0 0.0
    %200 = vmatprep.subr.mxu0 0.0
    %201 = vmatpush1.msra.mxu0 0.0
    %202 = vmatprep.subr.mxu0 0.0
    %203 = vmatpush1.msra.mxu0 0.0
    %204 = vmatprep.subr.mxu0 0.0
    %205 = vmatpush1.msra.mxu0 0.0
    %206 = vmatprep.subr.mxu0 0.0
    %207 = vmatpush1.msra.mxu0 0.0
    %208 = vmatprep.subr.mxu0 0.0
    %209 = vmatpush1.msra.mxu0 0.0
    %210 = vmatprep.subr.mxu0 0.0
    %211 = vmatpush1.msra.mxu0 0.0
    %212 = vmatprep.subr.mxu0 0.0
    %213 = vmatpush1.msra.mxu0 0.0
    %214 = vmatprep.subr.mxu0 0.0
    %215 = vmatpush1.msra.mxu0 0.0
    %216 = vmatprep.subr.mxu0 0.0
    %217 = vmatpush1.msra.mxu0 0.0
    %218 = vmatprep.subr.mxu0 0.0
    %219 = vmatpush1.msra.mxu0 0.0
    %220 = vmatprep.subr.mxu0 0.0
    %221 = vmatpush1.msra.mxu0 0.0
    %222 = vmatprep.subr.mxu0 0.0
    %223 = vmatpush1.msra.mxu0 0.0
    %224 = vmatprep.subr.mxu0 0.0
    %225 = vmatpush1.msra.mxu0 0.0
    %226 = vmatprep.subr.mxu0 0.0
    %227 = vmatpush1.msra.mxu0 0.0
    %228 = vmatprep.subr.mxu0 0.0
    %229 = vmatpush1.msra.mxu0 0.0
    %230 = vmatprep.subr.mxu0 0.0
    %231 = vmatpush1.msra.mxu0 0.0
    %232 = vmatprep.subr.mxu0 0.0
    %233 = vmatpush1.msra.mxu0 0.0
    %234 = vmatprep.mubr.f32.mxu0 0.0
    %235 = vmatmul.mubr.f32.gmra.mrb[0].mxu0 %v165
    %v236 = vpop.f32.mrb[0].mxu0
    %v237 = vadd.f32 %v162, %v236
    %v238 = vpop.f32.mrb[0].mxu0
    %239 = vdwg.mxu0
    %v240 = vmax.f32 %v237, 0.0
    %v241 = vld [vmem:[%s5] sm:$0xff]
    %v242 = vld [vmem:[%s5 + $0x8] sm:$0xf]
    %v243 = vld [vmem:[%s6] sm:$0x1]
    %v245 = vlaneseq
    %v246 = vshrl.u32 %v245, 7
    %v247 = vsub.s32 0, %v246
    %v248 = vrot.slane %v243, %v247
    %v251 = vsel %vm76, %v240, 0
    %v254 = vsel %vm80, %v242, 0
    %256 = vmatprep.subr.mxu0 0.0
    %257 = vmatpush1.msra.mxu0 %v241
    %258 = vmatprep.subr.mxu0 0.0
    %259 = vmatpush1.msra.mxu0 %v254
    %260 = vmatprep.subr.mxu0 0.0
    %261 = vmatpush1.msra.mxu0 0.0
    %262 = vmatprep.subr.mxu0 0.0
    %263 = vmatpush1.msra.mxu0 0.0
    %264 = vmatprep.subr.mxu0 0.0
    %265 = vmatpush1.msra.mxu0 0.0
    %266 = vmatprep.subr.mxu0 0.0
    %267 = vmatpush1.msra.mxu0 0.0
    %268 = vmatprep.subr.mxu0 0.0
    %269 = vmatpush1.msra.mxu0 0.0
    %270 = vmatprep.subr.mxu0 0.0
    %271 = vmatpush1.msra.mxu0 0.0
    %272 = vmatprep.subr.mxu0 0.0
    %273 = vmatpush1.msra.mxu0 0.0
    %274 = vmatprep.subr.mxu0 0.0
    %275 = vmatpush1.msra.mxu0 0.0
    %276 = vmatprep.subr.mxu0 0.0
    %277 = vmatpush1.msra.mxu0 0.0
    %278 = vmatprep.subr.mxu0 0.0
    %279 = vmatpush1.msra.mxu0 0.0
    %280 = vmatprep.subr.mxu0 0.0
    %281 = vmatpush1.msra.mxu0 0.0
    %282 = vmatprep.subr.mxu0 0.0
    %283 = vmatpush1.msra.mxu0 0.0
    %284 = vmatprep.subr.mxu0 0.0
    %285 = vmatpush1.msra.mxu0 0.0
    %286 = vmatprep.subr.mxu0 0.0
    %287 = vmatpush1.msra.mxu0 0.0
    %288 = vmatprep.subr.mxu0 0.0
    %289 = vmatpush1.msra.mxu0 0.0
    %290 = vmatprep.subr.mxu0 0.0
    %291 = vmatpush1.msra.mxu0 0.0
    %292 = vmatprep.subr.mxu0 0.0
    %293 = vmatpush1.msra.mxu0 0.0
    %294 = vmatprep.subr.mxu0 0.0
    %295 = vmatpush1.msra.mxu0 0.0
    %296 = vmatprep.subr.mxu0 0.0
    %297 = vmatpush1.msra.mxu0 0.0
    %298 = vmatprep.subr.mxu0 0.0
    %299 = vmatpush1.msra.mxu0 0.0
    %300 = vmatprep.subr.mxu0 0.0
    %301 = vmatpush1.msra.mxu0 0.0
    %302 = vmatprep.subr.mxu0 0.0
    %303 = vmatpush1.msra.mxu0 0.0
    %304 = vmatprep.subr.mxu0 0.0
    %305 = vmatpush1.msra.mxu0 0.0
    %306 = vmatprep.subr.mxu0 0.0
    %307 = vmatpush1.msra.mxu0 0.0
    %308 = vmatprep.subr.mxu0 0.0
    %309 = vmatpush1.msra.mxu0 0.0
    %310 = vmatprep.subr.mxu0 0.0
    %311 = vmatpush1.msra.mxu0 0.0
    %312 = vmatprep.subr.mxu0 0.0
    %313 = vmatpush1.msra.mxu0 0.0
    %314 = vmatprep.subr.mxu0 0.0
    %315 = vmatpush1.msra.mxu0 0.0
    %316 = vmatprep.subr.mxu0 0.0
    %317 = vmatpush1.msra.mxu0 0.0
    %318 = vmatprep.subr.mxu0 0.0
    %319 = vmatpush1.msra.mxu0 0.0
    %320 = vmatprep.mubr.f32.mxu0 0.0
    %321 = vmatmul.mubr.f32.gmra.mrb[0].mxu0 %v251
    %v322 = vpop.f32.mrb[0].mxu0
    %v323 = vadd.f32 %v248, %v322
    %v324 = vpop.f32.mrb[0].mxu0
    %325 = vdwg.mxu0
    %v326 = vxor.u32 %v323, 2147483648
    %v327 = vmul.f32 %v326, 1.442695
    %v328 = vpow.pop %v327
    %v329 = vadd.f32 %v328, 1.0
    %v330 = vrcp.pop %v329
    %v331 = vmul.f32 1.0, %v330
    %v332 = vmul.f32 %v331, 1.442695
    %v333 = vpow.pop %v332
    %v334 = vsel %vm76, %v333, 0.0
    %335 = vadd.xlane.f32.xlu0 %v334
    %v336 = vpop.xlane.xlu0 %335
    %v337 = vrcp.pop %v336
    %v338 = vmul.f32 %v333, %v337
    %339 = vst.msk [vmem:[#allocation8] sm:$0xff] %vm76, %v338
    // Predicated region
    $region42: #{tpu_custom_call.1} parent=1 // pred_check
      _
    $region43: #{tpu_custom_call.1} parent=1 // pred_check_branch
      %341 = sbr.rel (0) target = $region45
    $region44: #{tpu_custom_call.1} parent=1 // pred_region
      %s343 = ssub.s32 128, 128
      %344 = vsyncadd [#allocation4], %s343
      %s346 = sshll.u32 [#allocation8], 4
      %s347 = int_to_ptr.vmem [resolvable:$true] %s346
      %349 = dma.vmem_to_hbm [thread:$0]  %s347, 128, %s7, [#allocation4]
    $region45: #{tpu_custom_call.1} parent=1 // pred_fallthru
      _
    // Predicated region
    $region46: #{tpu_custom_call.1} parent=1 // pred_check
      _
    $region47: #{tpu_custom_call.1} parent=1 // pred_check_branch
      %351 = sbr.rel (0) target = $region49
    $region48: #{tpu_custom_call.1} parent=1 // pred_region
      %352 = dma.done [#allocation4], 128
    $region49: #{tpu_custom_call.1} parent=1 // pred_fallthru
      _
    %353 = vsyncpa [#allocation3], 1
    %354 = vsyncpa [#allocation6], 1
    %355 = vsyncpa [#allocation4], 1

</llo_original>
